<compile_context>
chip_gen: v7x
topology: tpu7x:2x2x1
jax: 0.10.0
libtpu: 0.0.40
codegen_flags: <defaults>
</compile_context>

<pallas_src>
import functools
import math
from typing import NamedTuple

import jax
import jax.numpy as jnp
from jax.experimental import pallas as pl
from jax.experimental.pallas import tpu as pltpu


USE_TANH_GELU = False  # True -> tanh-approx GELU (EUP); False -> exact erf (matches nn.GELU())


def _round_up(a, m):
    return (a + m - 1) // m * m


def _cdiv(a, b):
    return -(-a // b)


def _gelu(h):
    if USE_TANH_GELU:
        c = math.sqrt(2.0 / math.pi)
        return 0.5 * h * (1.0 + jnp.tanh(c * (h + 0.044715 * h * h * h)))
    return 0.5 * h * (1.0 + jax.lax.erf(h * (1.0 / math.sqrt(2.0))))


class StaticCfg(NamedTuple):
    dim_in: int
    lane: int
    n_layers: int
    n1: int        # number of layers in linear_model1
    n_b: int       # padded bias-row count
    n_steps: int


# ----------------------------------------------------------------------------
# Kernel
# ----------------------------------------------------------------------------
def _make_kernel(static: StaticCfg):
    lane, n_layers, n1 = static.lane, static.n_layers, static.n1

    def kernel(idx_ref, x_ref, w_ref, b_ref, o_ref):
        del idx_ref                              # only consumed by index_maps
        h = x_ref[...].astype(jnp.float32)       # (TB, lane), lane-dense
        b_all = b_ref[0]                         # (n_b, lane), step-fused biases
        for li in range(n_layers):
            w = w_ref[li * lane:(li + 1) * lane, :]       # static (lane, lane) view
            h = jnp.dot(h, w, preferred_element_type=jnp.float32) + b_all[li:li + 1, :]
            # GELU after every layer except the last of each MLP stack.
            # (emb row is already folded into layer n1-1's bias; that layer,
            #  like the final layer, has no activation after it.)
            if li != n1 - 1 and li != n_layers - 1:
                h = _gelu(h)
        o_ref[...] = h.astype(o_ref.dtype)       # lane-dense (TB, lane) store
        # TODO(synk): for very large B, store the output transposed (dim_in, B)
        # or in bf16 to avoid writing the 16x lane padding back to HBM.

    return kernel


# ----------------------------------------------------------------------------
# Parameter construction (deterministic, mimics PyTorch default Linear init).
# Weights stored as (fan_in, fan_out) = transpose of PyTorch's (out, in).
# ----------------------------------------------------------------------------
def _init_linear(key, fan_in, fan_out):
    kw, kb = jax.random.split(key)
    bound = 1.0 / math.sqrt(fan_in)
    w = jax.random.uniform(kw, (fan_in, fan_out), jnp.float32, -bound, bound)
    b = jax.random.uniform(kb, (fan_out,), jnp.float32, -bound, bound)
    return w, b


def _init_mlp(key, dim_in, dim_hidden, dim_out, num_layer):
    dims = [(dim_in, dim_hidden)] + [(dim_hidden, dim_hidden)] * num_layer \
        + [(dim_hidden, dim_out)]
    keys = jax.random.split(key, len(dims))
    return [_init_linear(k, fi, fo) for k, (fi, fo) in zip(keys, dims)]


def init_model_params(key, dim_in, dim_hidden, num_layer, n_steps, sigma_min, sigma_max):
    k1, k2, k3 = jax.random.split(key, 3)
    sigmas = jnp.exp(
        jnp.linspace(math.log(sigma_max), math.log(sigma_min), n_steps, dtype=jnp.float32))
    return {
        "sigmas": sigmas,
        "mlp1": _init_mlp(k1, dim_in, dim_hidden, dim_hidden, num_layer),
        "emb": jax.random.normal(k2, (n_steps, dim_hidden), jnp.float32),  # nn.Embedding ~ N(0,1)
        "mlp2": _init_mlp(k3, dim_hidden, dim_hidden, dim_in, num_layer),
    }


# ----------------------------------------------------------------------------
# One-time packing (hoisted out of the sampling loop).
# ----------------------------------------------------------------------------
def pack_params(params):
    layers = params["mlp1"] + params["mlp2"]
    n1 = len(params["mlp1"])
    n_layers = len(layers)
    dim_in = layers[0][0].shape[0]
    dim_hidden = params["emb"].shape[1]
    n_steps = params["emb"].shape[0]

    lane = max(128, _round_up(max(dim_in, dim_hidden), 128))
    n_b = _round_up(n_layers, 8)

    # Weight slab: every layer padded to (lane, lane); concatenated on sublanes.
    w_blocks = []
    b_rows = jnp.zeros((n_b, lane), jnp.float32)
    for li, (w, b) in enumerate(layers):
        fi, fo = w.shape
        w_blocks.append(jnp.zeros((lane, lane), jnp.float32).at[:fi, :fo].set(w))
        b_rows = b_rows.at[li, :fo].set(b)
    packed_w = jnp.concatenate(w_blocks, axis=0)             # (n_layers*lane, lane)

    # Per-step fused bias slab: emb[t] folded into the last linear_model1 bias
    # (valid: no activation between that layer and the "+ embedding").
    emb_pad = jnp.zeros((n_steps, lane), jnp.float32).at[:, :dim_hidden].set(params["emb"])
    bias_slab = jnp.broadcast_to(b_rows[None], (n_steps, n_b, lane))
    bias_slab = bias_slab.at[:, n1 - 1, :].add(emb_pad)      # (n_steps, n_b, lane)

    static = StaticCfg(dim_in=dim_in, lane=lane, n_layers=n_layers,
                       n1=n1, n_b=n_b, n_steps=n_steps)
    return static, packed_w, bias_slab


# ----------------------------------------------------------------------------
# Per-step forward (cheap: one pad + one pallas_call + one slice).
# ----------------------------------------------------------------------------
@functools.partial(jax.jit, static_argnums=0)
def model_forward(static: StaticCfg, packed_w, bias_slab, x, idx):
    """x: (B, dim_in) float32, idx: scalar int (python or traced)."""
    B = x.shape[0]
    lane = static.lane

    # Batch tiling: fat tiles amortize the per-grid-step overhead; use >=2
    # tiles when there is enough work so v7x's two TensorCores both get a share.
    B8 = _round_up(B, 8)
    n_tiles = _cdiv(B8, 1024)
    if B8 > 8:
        n_tiles = max(n_tiles, 2)
    TB = _round_up(_cdiv(B8, n_tiles), 8)
    B_pad = n_tiles * TB

    x_p = jnp.zeros((B_pad, lane), x.dtype).at[:B, :static.dim_in].set(x)
    idx_arr = jnp.asarray(idx, jnp.int32).reshape((1,))

    kernel = _make_kernel(static)
    w_rows = static.n_layers * lane
    n_b = static.n_b

    out = pl.pallas_call(
        kernel,
        out_shape=jax.ShapeDtypeStruct((B_pad, lane), x.dtype),
        grid_spec=pltpu.PrefetchScalarGridSpec(
            num_scalar_prefetch=1,
            grid=(n_tiles,),
            in_specs=[
                pl.BlockSpec((TB, lane), lambda i, idx_ref: (i, 0)),           # x tile
                pl.BlockSpec((w_rows, lane), lambda i, idx_ref: (0, 0)),       # weights, VMEM-resident
                pl.BlockSpec((1, n_b, lane), lambda i, idx_ref: (idx_ref[0], 0, 0)),  # step bias block
            ],
            out_specs=pl.BlockSpec((TB, lane), lambda i, idx_ref: (i, 0)),
        ),
        compiler_params=pltpu.CompilerParams(dimension_semantics=("parallel",)),
    )(idx_arr, x_p, packed_w, bias_slab)

    return out[:B, :static.dim_in]


# ----------------------------------------------------------------------------
# Pure-JAX reference (mirrors the PyTorch forward exactly).
# ----------------------------------------------------------------------------
def model_forward_ref(params, x, idx):
    def mlp(layers, h):
        for i, (w, b) in enumerate(layers):
            h = jnp.dot(h, w, precision=jax.lax.Precision.HIGHEST) + b
            if i + 1 != len(layers):
                h = 0.5 * h * (1.0 + jax.lax.erf(h / math.sqrt(2.0)))
        return h

    h = mlp(params["mlp1"], x)
    h = h + params["emb"][jnp.asarray(idx, jnp.int32)][None, :]
    return mlp(params["mlp2"], h)


if __name__ == "__main__":
    # Small shapes consistent with the module.
    dim_in, dim_hidden, num_layer = 8, 32, 1
    n_steps, sigma_min, sigma_max = 10, 0.01, 1.0
    B = 2
    idx = 3

    key = jax.random.PRNGKey(0)
    kp, kx = jax.random.split(key)
    params = init_model_params(kp, dim_in, dim_hidden, num_layer,
                               n_steps, sigma_min, sigma_max)
    x = jax.random.normal(kx, (B, dim_in), jnp.float32)

    # One-time packing (outside any sampling loop).
    static, packed_w, bias_slab = pack_params(params)

    # idx is traced -> a jitted sampling loop compiles once for all steps.
    out = model_forward(static, packed_w, bias_slab, x, jnp.int32(idx))
    out = jax.block_until_ready(out)

    ref = model_forward_ref(params, x, idx)
    assert out.shape == (B, dim_in)
    assert jnp.allclose(out, ref, atol=1e-3, rtol=1e-3), "mismatch vs pure-JAX reference"

    print("KERNEL_OK")
</pallas_src>

<mosaic_0001>
module attributes {stable_mosaic.version = 11 : i64} {
  func.func @kernel(%arg0: i32, %arg1: memref<1xi32, #tpu.memory_space<smem>>, %arg2: memref<8x128xf32, #tpu.memory_space<vmem>>, %arg3: memref<768x128xf32, #tpu.memory_space<vmem>>, %arg4: memref<1x8x128xf32, #tpu.memory_space<vmem>>, %arg5: memref<8x128xf32, #tpu.memory_space<vmem>>) attributes {dimension_semantics = [#tpu.dimension_semantics<parallel>], iteration_bounds = array<i64: 1>, scalar_prefetch = 1 : i64, scratch_operands = 0 : i64, tpu.core_type = #tpu.core_type<tc>, window_params = [{transform_indices = @transform_0, window_bounds = array<i64: 8, 128>}, {pipeline_mode = #tpu.pipeline_mode<synchronous>, transform_indices = @transform_1, window_bounds = array<i64: 768, 128>}, {transform_indices = @transform_2, window_bounds = array<i64: 1, 8, 128>}, {transform_indices = @transform_3, window_bounds = array<i64: 8, 128>}]} {
    %c0 = arith.constant 0 : index
    %c0_0 = arith.constant 0 : index
    %0 = vector.load %arg2[%c0, %c0_0] : memref<8x128xf32, #tpu.memory_space<vmem>>, vector<8x128xf32>
    %c0_1 = arith.constant 0 : index
    %c0_2 = arith.constant 0 : index
    %c0_3 = arith.constant 0 : index
    %1 = vector.load %arg4[%c0_1, %c0_2, %c0_3] : memref<1x8x128xf32, #tpu.memory_space<vmem>>, vector<1x8x128xf32>
    %2 = vector.shape_cast %1 : vector<1x8x128xf32> to vector<8x128xf32>
    %c0_4 = arith.constant 0 : index
    %c0_5 = arith.constant 0 : index
    %3 = vector.load %arg3[%c0_4, %c0_5] : memref<768x128xf32, #tpu.memory_space<vmem>>, vector<128x128xf32>
    %cst = arith.constant dense<0.000000e+00> : vector<8x128xf32>
    %4 = tpu.matmul %0, %3, %cst {dimension_numbers = #tpu.dot_dimension_numbers<[1], [0], [0], [1], [0, 0, 1, 1], [], []>} : vector<8x128xf32>, vector<128x128xf32>, vector<8x128xf32> -> vector<8x128xf32>
    %5 = vector.extract_strided_slice %2 {offsets = [0, 0], sizes = [1, 128], strides = [1, 1]} : vector<8x128xf32> to vector<1x128xf32>
    %6 = vector.broadcast %5 : vector<1x128xf32> to vector<8x128xf32>
    %7 = arith.addf %4, %6 : vector<8x128xf32>
    %cst_6 = arith.constant 5.000000e-01 : f32
    %8 = vector.broadcast %cst_6 : f32 to vector<8x128xf32>
    %9 = arith.mulf %8, %7 : vector<8x128xf32>
    %cst_7 = arith.constant 0.707106769 : f32
    %10 = vector.broadcast %cst_7 : f32 to vector<8x128xf32>
    %11 = arith.mulf %7, %10 : vector<8x128xf32>
    %12 = math.erf %11 : vector<8x128xf32>
    %cst_8 = arith.constant 1.000000e+00 : f32
    %13 = vector.broadcast %cst_8 : f32 to vector<8x128xf32>
    %14 = arith.addf %13, %12 : vector<8x128xf32>
    %15 = arith.mulf %9, %14 : vector<8x128xf32>
    %c128 = arith.constant 128 : index
    %c0_9 = arith.constant 0 : index
    %16 = vector.load %arg3[%c128, %c0_9] : memref<768x128xf32, #tpu.memory_space<vmem>>, vector<128x128xf32>
    %cst_10 = arith.constant dense<0.000000e+00> : vector<8x128xf32>
    %17 = tpu.matmul %15, %16, %cst_10 {dimension_numbers = #tpu.dot_dimension_numbers<[1], [0], [0], [1], [0, 0, 1, 1], [], []>} : vector<8x128xf32>, vector<128x128xf32>, vector<8x128xf32> -> vector<8x128xf32>
    %18 = vector.extract_strided_slice %2 {offsets = [1, 0], sizes = [1, 128], strides = [1, 1]} : vector<8x128xf32> to vector<1x128xf32>
    %19 = vector.broadcast %18 : vector<1x128xf32> to vector<8x128xf32>
    %20 = arith.addf %17, %19 : vector<8x128xf32>
    %cst_11 = arith.constant 5.000000e-01 : f32
    %21 = vector.broadcast %cst_11 : f32 to vector<8x128xf32>
    %22 = arith.mulf %21, %20 : vector<8x128xf32>
    %cst_12 = arith.constant 0.707106769 : f32
    %23 = vector.broadcast %cst_12 : f32 to vector<8x128xf32>
    %24 = arith.mulf %20, %23 : vector<8x128xf32>
    %25 = math.erf %24 : vector<8x128xf32>
    %cst_13 = arith.constant 1.000000e+00 : f32
    %26 = vector.broadcast %cst_13 : f32 to vector<8x128xf32>
    %27 = arith.addf %26, %25 : vector<8x128xf32>
    %28 = arith.mulf %22, %27 : vector<8x128xf32>
    %c256 = arith.constant 256 : index
    %c0_14 = arith.constant 0 : index
    %29 = vector.load %arg3[%c256, %c0_14] : memref<768x128xf32, #tpu.memory_space<vmem>>, vector<128x128xf32>
    %cst_15 = arith.constant dense<0.000000e+00> : vector<8x128xf32>
    %30 = tpu.matmul %28, %29, %cst_15 {dimension_numbers = #tpu.dot_dimension_numbers<[1], [0], [0], [1], [0, 0, 1, 1], [], []>} : vector<8x128xf32>, vector<128x128xf32>, vector<8x128xf32> -> vector<8x128xf32>
    %31 = vector.extract_strided_slice %2 {offsets = [2, 0], sizes = [1, 128], strides = [1, 1]} : vector<8x128xf32> to vector<1x128xf32>
    %32 = vector.broadcast %31 : vector<1x128xf32> to vector<8x128xf32>
    %33 = arith.addf %30, %32 : vector<8x128xf32>
    %c384 = arith.constant 384 : index
    %c0_16 = arith.constant 0 : index
    %34 = vector.load %arg3[%c384, %c0_16] : memref<768x128xf32, #tpu.memory_space<vmem>>, vector<128x128xf32>
    %cst_17 = arith.constant dense<0.000000e+00> : vector<8x128xf32>
    %35 = tpu.matmul %33, %34, %cst_17 {dimension_numbers = #tpu.dot_dimension_numbers<[1], [0], [0], [1], [0, 0, 1, 1], [], []>} : vector<8x128xf32>, vector<128x128xf32>, vector<8x128xf32> -> vector<8x128xf32>
    %36 = vector.extract_strided_slice %2 {offsets = [3, 0], sizes = [1, 128], strides = [1, 1]} : vector<8x128xf32> to vector<1x128xf32>
    %37 = vector.broadcast %36 : vector<1x128xf32> to vector<8x128xf32>
    %38 = arith.addf %35, %37 : vector<8x128xf32>
    %cst_18 = arith.constant 5.000000e-01 : f32
    %39 = vector.broadcast %cst_18 : f32 to vector<8x128xf32>
    %40 = arith.mulf %39, %38 : vector<8x128xf32>
    %cst_19 = arith.constant 0.707106769 : f32
    %41 = vector.broadcast %cst_19 : f32 to vector<8x128xf32>
    %42 = arith.mulf %38, %41 : vector<8x128xf32>
    %43 = math.erf %42 : vector<8x128xf32>
    %cst_20 = arith.constant 1.000000e+00 : f32
    %44 = vector.broadcast %cst_20 : f32 to vector<8x128xf32>
    %45 = arith.addf %44, %43 : vector<8x128xf32>
    %46 = arith.mulf %40, %45 : vector<8x128xf32>
    %c512 = arith.constant 512 : index
    %c0_21 = arith.constant 0 : index
    %47 = vector.load %arg3[%c512, %c0_21] : memref<768x128xf32, #tpu.memory_space<vmem>>, vector<128x128xf32>
    %cst_22 = arith.constant dense<0.000000e+00> : vector<8x128xf32>
    %48 = tpu.matmul %46, %47, %cst_22 {dimension_numbers = #tpu.dot_dimension_numbers<[1], [0], [0], [1], [0, 0, 1, 1], [], []>} : vector<8x128xf32>, vector<128x128xf32>, vector<8x128xf32> -> vector<8x128xf32>
    %49 = vector.extract_strided_slice %2 {offsets = [4, 0], sizes = [1, 128], strides = [1, 1]} : vector<8x128xf32> to vector<1x128xf32>
    %50 = vector.broadcast %49 : vector<1x128xf32> to vector<8x128xf32>
    %51 = arith.addf %48, %50 : vector<8x128xf32>
    %cst_23 = arith.constant 5.000000e-01 : f32
    %52 = vector.broadcast %cst_23 : f32 to vector<8x128xf32>
    %53 = arith.mulf %52, %51 : vector<8x128xf32>
    %cst_24 = arith.constant 0.707106769 : f32
    %54 = vector.broadcast %cst_24 : f32 to vector<8x128xf32>
    %55 = arith.mulf %51, %54 : vector<8x128xf32>
    %56 = math.erf %55 : vector<8x128xf32>
    %cst_25 = arith.constant 1.000000e+00 : f32
    %57 = vector.broadcast %cst_25 : f32 to vector<8x128xf32>
    %58 = arith.addf %57, %56 : vector<8x128xf32>
    %59 = arith.mulf %53, %58 : vector<8x128xf32>
    %c640 = arith.constant 640 : index
    %c0_26 = arith.constant 0 : index
    %60 = vector.load %arg3[%c640, %c0_26] : memref<768x128xf32, #tpu.memory_space<vmem>>, vector<128x128xf32>
    %cst_27 = arith.constant dense<0.000000e+00> : vector<8x128xf32>
    %61 = tpu.matmul %59, %60, %cst_27 {dimension_numbers = #tpu.dot_dimension_numbers<[1], [0], [0], [1], [0, 0, 1, 1], [], []>} : vector<8x128xf32>, vector<128x128xf32>, vector<8x128xf32> -> vector<8x128xf32>
    %62 = vector.extract_strided_slice %2 {offsets = [5, 0], sizes = [1, 128], strides = [1, 1]} : vector<8x128xf32> to vector<1x128xf32>
    %63 = vector.broadcast %62 : vector<1x128xf32> to vector<8x128xf32>
    %64 = arith.addf %61, %63 : vector<8x128xf32>
    %c0_28 = arith.constant 0 : index
    %c0_29 = arith.constant 0 : index
    %65 = vector.load %arg5[%c0_28, %c0_29] : memref<8x128xf32, #tpu.memory_space<vmem>>, vector<8x128xf32>
    tpu.vector_store %arg5[%c0_28, %c0_29], %64 {strides = array<i32>} : memref<8x128xf32, #tpu.memory_space<vmem>>, vector<8x128xf32>,
    return
  }
  func.func @transform_0(%arg0: i32, %arg1: memref<1xi32, #tpu.memory_space<smem>>) -> (i32, i32) {
    %c0_i32 = arith.constant 0 : i32
    %c0_i32_0 = arith.constant 0 : i32
    return %arg0, %c0_i32 : i32, i32
  }
  func.func @transform_1(%arg0: i32, %arg1: memref<1xi32, #tpu.memory_space<smem>>) -> (i32, i32) {
    %c0_i32 = arith.constant 0 : i32
    %c0_i32_0 = arith.constant 0 : i32
    %c0_i32_1 = arith.constant 0 : i32
    return %c0_i32, %c0_i32_0 : i32, i32
  }
  func.func @transform_2(%arg0: i32, %arg1: memref<1xi32, #tpu.memory_space<smem>>) -> (i32, i32, i32) {
    %c0 = arith.constant 0 : index
    %0 = memref.load %arg1[%c0] : memref<1xi32, #tpu.memory_space<smem>>
    %c0_i32 = arith.constant 0 : i32
    %c0_i32_0 = arith.constant 0 : i32
    %c0_i32_1 = arith.constant 0 : i32
    return %0, %c0_i32, %c0_i32_0 : i32, i32, i32
  }
  func.func @transform_3(%arg0: i32, %arg1: memref<1xi32, #tpu.memory_space<smem>>) -> (i32, i32) {
    %c0_i32 = arith.constant 0 : i32
    %c0_i32_0 = arith.constant 0 : i32
    return %arg0, %c0_i32 : i32, i32
  }
}

</mosaic_0001>

<llo_original>
// kernel: model_forward.1
$region0: #{model_forward.1}
  #allocation0 [shape = 'u32[]', space=smem, size = 0x4, offset = 0x4, fixed_abs, tag = 'smem constant byte address 0x4 - core index']
  #allocation1 [shape = 'u32[144,128]{1,0:T(1,128)}', space=vmem, size = 0x12000, scoped, tag = 'internal scratch']
  #allocation2 [shape = 's32[1]{0}', space=sflag, size = 0x4, scoped, tag = 'scoped memory for model_forward.1']
  #allocation3 [shape = 's32[1]{0:T(128)S(6)}', space=smem, size = 0x200, scoped, tag = 'prefetched SMEM operand 0']
  %s0 = inlined_call_operand.<no memory space> [shape: s32[1], index: 0, kind: input, shape index: {}]
  %s1 = inlined_call_operand.vmem [shape: f32[8,128], index: 1, kind: input, shape index: {}]
  %s2 = inlined_call_operand.hbm [shape: f32[768,128], index: 2, kind: input, shape index: {}]
  %s3 = inlined_call_operand.hbm [shape: f32[10,8,128], index: 3, kind: input, shape index: {}]
  %s4 = inlined_call_operand.vmem [shape: f32[8,128], index: 4, kind: output, shape index: {}]
  %s5 = sld [smem:[#allocation0]]
  $region30: #{model_forward.1} parent=0
    _
  %s7 = ssub.s32 1, %s5
  %s8 = scalar_select 0, %s7, %s5
  %9 = sst [smem:[#allocation3]] %s0
  $region1: #{model_forward.1} parent=0
    #allocation4 [shape = 'u8[393216]{0}', space=vmem, size = 0x60000, scoped, tag = 'input window, operand 2, single buffered']
    #allocation5 [shape = 's32[1]{0}', space=sflag, size = 0x4, scoped, tag = 'scoped memory for model_forward.1']
    #allocation6 [shape = 'u8[4096]{0}', space=vmem, size = 0x1000, scoped, tag = 'input window, operand 3, single buffered']
    #allocation7 [shape = 's32[1]{0}', space=sflag, size = 0x4, scoped, tag = 'scoped memory for model_forward.1']
    %10 = vsyncpa [#allocation5], 0
    %11 = vsyncpa [#allocation7], 0
    // Predicated region
    $region2: #{model_forward.1} parent=1 // pred_check
      _
    $region3: #{model_forward.1} parent=1 // pred_check_branch
      %13 = sbr.rel (0) target = $region5
    $region4: #{model_forward.1} parent=1 // pred_region
      _
    $region5: #{model_forward.1} parent=1 // pred_fallthru
      _
    // Predicated region
    $region6: #{model_forward.1} parent=1 // pred_check
      _
    $region7: #{model_forward.1} parent=1 // pred_check_branch
      %15 = sbr.rel (0) target = $region9
    $region8: #{model_forward.1} parent=1 // pred_region
      %s17 = ssub.s32 12288, 12288
      %18 = vsyncadd [#allocation5], %s17
      %s19 = sshll.u32 [#allocation4], 4
      %s20 = int_to_ptr.vmem [resolvable:$true] %s19
      %25 = dma.hbm_to_vmem [thread:$0]  %s2, 12288, %s20, [#allocation5], 128, 128, 8
    $region9: #{model_forward.1} parent=1 // pred_fallthru
      _
    // Predicated region
    $region10: #{model_forward.1} parent=1 // pred_check
      _
    $region11: #{model_forward.1} parent=1 // pred_check_branch
      %27 = sbr.rel (0) target = $region13
    $region12: #{model_forward.1} parent=1 // pred_region
      %s28 = sld [smem:[#allocation3]]
      %s30 = ssub.s32 128, 128
      %31 = vsyncadd [#allocation7], %s30
      %s32 = smul.addr %s28, 128
      %s33 = scalar_lea.hbm %s3, %s32
      %s35 = sshll.u32 [#allocation6], 4
      %s36 = int_to_ptr.vmem [resolvable:$true] %s35
      %38 = dma.hbm_to_vmem [thread:$0]  %s33, 128, %s36, [#allocation7]
    $region13: #{model_forward.1} parent=1 // pred_fallthru
      _
    // Predicated region
    $region14: #{model_forward.1} parent=1 // pred_check
      _
    $region15: #{model_forward.1} parent=1 // pred_check_branch
      %40 = sbr.rel (0) target = $region17
    $region16: #{model_forward.1} parent=1 // pred_region
      %41 = dma.done [#allocation5], 12288
    $region17: #{model_forward.1} parent=1 // pred_fallthru
      _
    // Predicated region
    $region18: #{model_forward.1} parent=1 // pred_check
      _
    $region19: #{model_forward.1} parent=1 // pred_check_branch
      %43 = sbr.rel (0) target = $region21
    $region20: #{model_forward.1} parent=1 // pred_region
      %44 = dma.done [#allocation7], 128
    $region21: #{model_forward.1} parent=1 // pred_fallthru
      _
    %s45 = sld [smem:[#allocation3]]
    %v46 = vld [vmem:[%s1] sm:$0xff]
    %v47 = vld [vmem:[#allocation6] sm:$0xff]
    %v48 = vld [vmem:[#allocation4] sm:$0xff]
    %v49 = vld [vmem:[#allocation4 + $0x8] sm:$0xff]
    %v50 = vld [vmem:[#allocation4 + $0x10] sm:$0xff]
    %v51 = vld [vmem:[#allocation4 + $0x18] sm:$0xff]
    %v52 = vld [vmem:[#allocation4 + $0x20] sm:$0xff]
    %v53 = vld [vmem:[#allocation4 + $0x28] sm:$0xff]
    %v54 = vld [vmem:[#allocation4 + $0x30] sm:$0xff]
    %v55 = vld [vmem:[#allocation4 + $0x38] sm:$0xff]
    %v56 = vld [vmem:[#allocation4 + $0x40] sm:$0xff]
    %v57 = vld [vmem:[#allocation4 + $0x48] sm:$0xff]
    %v58 = vld [vmem:[#allocation4 + $0x50] sm:$0xff]
    %v59 = vld [vmem:[#allocation4 + $0x58] sm:$0xff]
    %v60 = vld [vmem:[#allocation4 + $0x60] sm:$0xff]
    %v61 = vld [vmem:[#allocation4 + $0x68] sm:$0xff]
    %v62 = vld [vmem:[#allocation4 + $0x70] sm:$0xff]
    %v63 = vld [vmem:[#allocation4 + $0x78] sm:$0xff]
    %v64 = vlaneseq
    %v65 = vshrl.u32 %v64, 7
    %v66 = vsub.s32 0, %v65
    %v67 = vrot.slane %v47, %v66
    %68 = vmatprep.subr.mxu0 0.0
    %69 = vmatpush1.msra.mxu0 %v48
    %70 = vmatprep.subr.mxu0 0.0
    %71 = vmatpush1.msra.mxu0 %v49
    %72 = vmatprep.subr.mxu0 0.0
    %73 = vmatpush1.msra.mxu0 %v50
    %74 = vmatprep.subr.mxu0 0.0
    %75 = vmatpush1.msra.mxu0 %v51
    %76 = vmatprep.subr.mxu0 0.0
    %77 = vmatpush1.msra.mxu0 %v52
    %78 = vmatprep.subr.mxu0 0.0
    %79 = vmatpush1.msra.mxu0 %v53
    %80 = vmatprep.subr.mxu0 0.0
    %81 = vmatpush1.msra.mxu0 %v54
    %82 = vmatprep.subr.mxu0 0.0
    %83 = vmatpush1.msra.mxu0 %v55
    %84 = vmatprep.subr.mxu0 0.0
    %85 = vmatpush1.msra.mxu0 %v56
    %86 = vmatprep.subr.mxu0 0.0
    %87 = vmatpush1.msra.mxu0 %v57
    %88 = vmatprep.subr.mxu0 0.0
    %89 = vmatpush1.msra.mxu0 %v58
    %90 = vmatprep.subr.mxu0 0.0
    %91 = vmatpush1.msra.mxu0 %v59
    %92 = vmatprep.subr.mxu0 0.0
    %93 = vmatpush1.msra.mxu0 %v60
    %94 = vmatprep.subr.mxu0 0.0
    %95 = vmatpush1.msra.mxu0 %v61
    %96 = vmatprep.subr.mxu0 0.0
    %97 = vmatpush1.msra.mxu0 %v62
    %98 = vmatprep.subr.mxu0 0.0
    %99 = vmatpush1.msra.mxu0 %v63
    %100 = vmatprep.subr.mxu0 0.0
    %101 = vmatpush1.msra.mxu0 0.0
    %102 = vmatprep.subr.mxu0 0.0
    %103 = vmatpush1.msra.mxu0 0.0
    %104 = vmatprep.subr.mxu0 0.0
    %105 = vmatpush1.msra.mxu0 0.0
    %106 = vmatprep.subr.mxu0 0.0
    %107 = vmatpush1.msra.mxu0 0.0
    %108 = vmatprep.subr.mxu0 0.0
    %109 = vmatpush1.msra.mxu0 0.0
    %110 = vmatprep.subr.mxu0 0.0
    %111 = vmatpush1.msra.mxu0 0.0
    %112 = vmatprep.subr.mxu0 0.0
    %113 = vmatpush1.msra.mxu0 0.0
    %114 = vmatprep.subr.mxu0 0.0
    %115 = vmatpush1.msra.mxu0 0.0
    %116 = vmatprep.subr.mxu0 0.0
    %117 = vmatpush1.msra.mxu0 0.0
    %118 = vmatprep.subr.mxu0 0.0
    %119 = vmatpush1.msra.mxu0 0.0
    %120 = vmatprep.subr.mxu0 0.0
    %121 = vmatpush1.msra.mxu0 0.0
    %122 = vmatprep.subr.mxu0 0.0
    %123 = vmatpush1.msra.mxu0 0.0
    %124 = vmatprep.subr.mxu0 0.0
    %125 = vmatpush1.msra.mxu0 0.0
    %126 = vmatprep.subr.mxu0 0.0
    %127 = vmatpush1.msra.mxu0 0.0
    %128 = vmatprep.subr.mxu0 0.0
    %129 = vmatpush1.msra.mxu0 0.0
    %130 = vmatprep.subr.mxu0 0.0
    %131 = vmatpush1.msra.mxu0 0.0
    %132 = vmatprep.mubr.f32.mxu0 0.0
    %133 = vmatmul.mubr.f32.gmra.mrb[0].mxu0 %v46
    %v134 = vpop.f32.mrb[0].mxu0
    %v135 = vadd.f32 %v67, %v134
    %v136 = vpop.f32.mrb[0].mxu0
    %137 = vdwg.mxu0
    %v138 = vmul.f32 %v135, 0.5
    %v139 = vmul.f32 %v135, 0.70710677
    %v140 = verf.f32.pop %v139
    %v141 = vadd.f32 %v140, 1.0
    %v142 = vmul.f32 %v138, %v141
    %v143 = vld [vmem:[#allocation4 + $0x80] sm:$0xff]
    %v144 = vld [vmem:[#allocation4 + $0x88] sm:$0xff]
    %v145 = vld [vmem:[#allocation4 + $0x90] sm:$0xff]
    %v146 = vld [vmem:[#allocation4 + $0x98] sm:$0xff]
    %v147 = vld [vmem:[#allocation4 + $0xa0] sm:$0xff]
    %v148 = vld [vmem:[#allocation4 + $0xa8] sm:$0xff]
    %v149 = vld [vmem:[#allocation4 + $0xb0] sm:$0xff]
    %v150 = vld [vmem:[#allocation4 + $0xb8] sm:$0xff]
    %v151 = vld [vmem:[#allocation4 + $0xc0] sm:$0xff]
    %v152 = vld [vmem:[#allocation4 + $0xc8] sm:$0xff]
    %v153 = vld [vmem:[#allocation4 + $0xd0] sm:$0xff]
    %v154 = vld [vmem:[#allocation4 + $0xd8] sm:$0xff]
    %v155 = vld [vmem:[#allocation4 + $0xe0] sm:$0xff]
    %v156 = vld [vmem:[#allocation4 + $0xe8] sm:$0xff]
    %v157 = vld [vmem:[#allocation4 + $0xf0] sm:$0xff]
    %v158 = vld [vmem:[#allocation4 + $0xf8] sm:$0xff]
    %v159 = vlaneseq
    %v160 = vshrl.u32 %v159, 7
    %v161 = vsub.s32 1, %v160
    %v162 = vrot.slane %v47, %v161
    %163 = vmatprep.subr.mxu0 0.0
    %164 = vmatpush1.msra.mxu0 %v143
    %165 = vmatprep.subr.mxu0 0.0
    %166 = vmatpush1.msra.mxu0 %v144
    %167 = vmatprep.subr.mxu0 0.0
    %168 = vmatpush1.msra.mxu0 %v145
    %169 = vmatprep.subr.mxu0 0.0
    %170 = vmatpush1.msra.mxu0 %v146
    %171 = vmatprep.subr.mxu0 0.0
    %172 = vmatpush1.msra.mxu0 %v147
    %173 = vmatprep.subr.mxu0 0.0
    %174 = vmatpush1.msra.mxu0 %v148
    %175 = vmatprep.subr.mxu0 0.0
    %176 = vmatpush1.msra.mxu0 %v149
    %177 = vmatprep.subr.mxu0 0.0
    %178 = vmatpush1.msra.mxu0 %v150
    %179 = vmatprep.subr.mxu0 0.0
    %180 = vmatpush1.msra.mxu0 %v151
    %181 = vmatprep.subr.mxu0 0.0
    %182 = vmatpush1.msra.mxu0 %v152
    %183 = vmatprep.subr.mxu0 0.0
    %184 = vmatpush1.msra.mxu0 %v153
    %185 = vmatprep.subr.mxu0 0.0
    %186 = vmatpush1.msra.mxu0 %v154
    %187 = vmatprep.subr.mxu0 0.0
    %188 = vmatpush1.msra.mxu0 %v155
    %189 = vmatprep.subr.mxu0 0.0
    %190 = vmatpush1.msra.mxu0 %v156
    %191 = vmatprep.subr.mxu0 0.0
    %192 = vmatpush1.msra.mxu0 %v157
    %193 = vmatprep.subr.mxu0 0.0
    %194 = vmatpush1.msra.mxu0 %v158
    %195 = vmatprep.subr.mxu0 0.0
    %196 = vmatpush1.msra.mxu0 0.0
    %197 = vmatprep.subr.mxu0 0.0
    %198 = vmatpush1.msra.mxu0 0.0
    %199 = vmatprep.subr.mxu0 0.0
    %200 = vmatpush1.msra.mxu0 0.0
    %201 = vmatprep.subr.mxu0 0.0
    %202 = vmatpush1.msra.mxu0 0.0
    %203 = vmatprep.subr.mxu0 0.0
    %204 = vmatpush1.msra.mxu0 0.0
    %205 = vmatprep.subr.mxu0 0.0
    %206 = vmatpush1.msra.mxu0 0.0
    %207 = vmatprep.subr.mxu0 0.0
    %208 = vmatpush1.msra.mxu0 0.0
    %209 = vmatprep.subr.mxu0 0.0
    %210 = vmatpush1.msra.mxu0 0.0
    %211 = vmatprep.subr.mxu0 0.0
    %212 = vmatpush1.msra.mxu0 0.0
    %213 = vmatprep.subr.mxu0 0.0
    %214 = vmatpush1.msra.mxu0 0.0
    %215 = vmatprep.subr.mxu0 0.0
    %216 = vmatpush1.msra.mxu0 0.0
    %217 = vmatprep.subr.mxu0 0.0
    %218 = vmatpush1.msra.mxu0 0.0
    %219 = vmatprep.subr.mxu0 0.0
    %220 = vmatpush1.msra.mxu0 0.0
    %221 = vmatprep.subr.mxu0 0.0
    %222 = vmatpush1.msra.mxu0 0.0
    %223 = vmatprep.subr.mxu0 0.0
    %224 = vmatpush1.msra.mxu0 0.0
    %225 = vmatprep.subr.mxu0 0.0
    %226 = vmatpush1.msra.mxu0 0.0
    %227 = vmatprep.mubr.f32.mxu0 0.0
    %228 = vmatmul.mubr.f32.gmra.mrb[0].mxu0 %v142
    %v229 = vpop.f32.mrb[0].mxu0
    %v230 = vadd.f32 %v162, %v229
    %v231 = vpop.f32.mrb[0].mxu0
    %232 = vdwg.mxu0
    %v233 = vmul.f32 %v230, 0.5
    %v234 = vmul.f32 %v230, 0.70710677
    %v235 = verf.f32.pop %v234
    %v236 = vadd.f32 %v235, 1.0
    %v237 = vmul.f32 %v233, %v236
    %v238 = vld [vmem:[#allocation4 + $0x100] sm:$0xff]
    %v239 = vld [vmem:[#allocation4 + $0x108] sm:$0xff]
    %v240 = vld [vmem:[#allocation4 + $0x110] sm:$0xff]
    %v241 = vld [vmem:[#allocation4 + $0x118] sm:$0xff]
    %v242 = vld [vmem:[#allocation4 + $0x120] sm:$0xff]
    %v243 = vld [vmem:[#allocation4 + $0x128] sm:$0xff]
    %v244 = vld [vmem:[#allocation4 + $0x130] sm:$0xff]
    %v245 = vld [vmem:[#allocation4 + $0x138] sm:$0xff]
    %v246 = vld [vmem:[#allocation4 + $0x140] sm:$0xff]
    %v247 = vld [vmem:[#allocation4 + $0x148] sm:$0xff]
    %v248 = vld [vmem:[#allocation4 + $0x150] sm:$0xff]
    %v249 = vld [vmem:[#allocation4 + $0x158] sm:$0xff]
    %v250 = vld [vmem:[#allocation4 + $0x160] sm:$0xff]
    %v251 = vld [vmem:[#allocation4 + $0x168] sm:$0xff]
    %v252 = vld [vmem:[#allocation4 + $0x170] sm:$0xff]
    %v253 = vld [vmem:[#allocation4 + $0x178] sm:$0xff]
    %v254 = vlaneseq
    %v255 = vshrl.u32 %v254, 7
    %v256 = vsub.s32 2, %v255
    %v257 = vrot.slane %v47, %v256
    %258 = vmatprep.subr.mxu0 0.0
    %259 = vmatpush1.msra.mxu0 %v238
    %260 = vmatprep.subr.mxu0 0.0
    %261 = vmatpush1.msra.mxu0 %v239
    %262 = vmatprep.subr.mxu0 0.0
    %263 = vmatpush1.msra.mxu0 %v240
    %264 = vmatprep.subr.mxu0 0.0
    %265 = vmatpush1.msra.mxu0 %v241
    %266 = vmatprep.subr.mxu0 0.0
    %267 = vmatpush1.msra.mxu0 %v242
    %268 = vmatprep.subr.mxu0 0.0
    %269 = vmatpush1.msra.mxu0 %v243
    %270 = vmatprep.subr.mxu0 0.0
    %271 = vmatpush1.msra.mxu0 %v244
    %272 = vmatprep.subr.mxu0 0.0
    %273 = vmatpush1.msra.mxu0 %v245
    %274 = vmatprep.subr.mxu0 0.0
    %275 = vmatpush1.msra.mxu0 %v246
    %276 = vmatprep.subr.mxu0 0.0
    %277 = vmatpush1.msra.mxu0 %v247
    %278 = vmatprep.subr.mxu0 0.0
    %279 = vmatpush1.msra.mxu0 %v248
    %280 = vmatprep.subr.mxu0 0.0
    %281 = vmatpush1.msra.mxu0 %v249
    %282 = vmatprep.subr.mxu0 0.0
    %283 = vmatpush1.msra.mxu0 %v250
    %284 = vmatprep.subr.mxu0 0.0
    %285 = vmatpush1.msra.mxu0 %v251
    %286 = vmatprep.subr.mxu0 0.0
    %287 = vmatpush1.msra.mxu0 %v252
    %288 = vmatprep.subr.mxu0 0.0
    %289 = vmatpush1.msra.mxu0 %v253
    %290 = vmatprep.subr.mxu0 0.0
    %291 = vmatpush1.msra.mxu0 0.0
    %292 = vmatprep.subr.mxu0 0.0
    %293 = vmatpush1.msra.mxu0 0.0
    %294 = vmatprep.subr.mxu0 0.0
    %295 = vmatpush1.msra.mxu0 0.0
    %296 = vmatprep.subr.mxu0 0.0
    %297 = vmatpush1.msra.mxu0 0.0
    %298 = vmatprep.subr.mxu0 0.0
    %299 = vmatpush1.msra.mxu0 0.0
    %300 = vmatprep.subr.mxu0 0.0
    %301 = vmatpush1.msra.mxu0 0.0
    %302 = vmatprep.subr.mxu0 0.0
    %303 = vmatpush1.msra.mxu0 0.0
    %304 = vmatprep.subr.mxu0 0.0
    %305 = vmatpush1.msra.mxu0 0.0
    %306 = vmatprep.subr.mxu0 0.0
    %307 = vmatpush1.msra.mxu0 0.0
    %308 = vmatprep.subr.mxu0 0.0
    %309 = vmatpush1.msra.mxu0 0.0
    %310 = vmatprep.subr.mxu0 0.0
    %311 = vmatpush1.msra.mxu0 0.0
    %312 = vmatprep.subr.mxu0 0.0
    %313 = vmatpush1.msra.mxu0 0.0
    %314 = vmatprep.subr.mxu0 0.0
    %315 = vmatpush1.msra.mxu0 0.0
    %316 = vmatprep.subr.mxu0 0.0
    %317 = vmatpush1.msra.mxu0 0.0
    %318 = vmatprep.subr.mxu0 0.0
    %319 = vmatpush1.msra.mxu0 0.0
    %320 = vmatprep.subr.mxu0 0.0
    %321 = vmatpush1.msra.mxu0 0.0
    %322 = vmatprep.mubr.f32.mxu0 0.0
    %323 = vmatmul.mubr.f32.gmra.mrb[0].mxu0 %v237
    %v324 = vpop.f32.mrb[0].mxu0
    %v325 = vadd.f32 %v257, %v324
    %v326 = vpop.f32.mrb[0].mxu0
    %327 = vdwg.mxu0
    %v328 = vld [vmem:[#allocation4 + $0x180] sm:$0xff]
    %v329 = vld [vmem:[#allocation4 + $0x188] sm:$0xff]
    %v330 = vld [vmem:[#allocation4 + $0x190] sm:$0xff]
    %v331 = vld [vmem:[#allocation4 + $0x198] sm:$0xff]
    %v332 = vld [vmem:[#allocation4 + $0x1a0] sm:$0xff]
    %v333 = vld [vmem:[#allocation4 + $0x1a8] sm:$0xff]
    %v334 = vld [vmem:[#allocation4 + $0x1b0] sm:$0xff]
    %v335 = vld [vmem:[#allocation4 + $0x1b8] sm:$0xff]
    %v336 = vld [vmem:[#allocation4 + $0x1c0] sm:$0xff]
    %v337 = vld [vmem:[#allocation4 + $0x1c8] sm:$0xff]
    %v338 = vld [vmem:[#allocation4 + $0x1d0] sm:$0xff]
    %v339 = vld [vmem:[#allocation4 + $0x1d8] sm:$0xff]
    %v340 = vld [vmem:[#allocation4 + $0x1e0] sm:$0xff]
    %v341 = vld [vmem:[#allocation4 + $0x1e8] sm:$0xff]
    %v342 = vld [vmem:[#allocation4 + $0x1f0] sm:$0xff]
    %v343 = vld [vmem:[#allocation4 + $0x1f8] sm:$0xff]
    %v344 = vlaneseq
    %v345 = vshrl.u32 %v344, 7
    %v346 = vsub.s32 3, %v345
    %v347 = vrot.slane %v47, %v346
    %348 = vmatprep.subr.mxu0 0.0
    %349 = vmatpush1.msra.mxu0 %v328
    %350 = vmatprep.subr.mxu0 0.0
    %351 = vmatpush1.msra.mxu0 %v329
    %352 = vmatprep.subr.mxu0 0.0
    %353 = vmatpush1.msra.mxu0 %v330
    %354 = vmatprep.subr.mxu0 0.0
    %355 = vmatpush1.msra.mxu0 %v331
    %356 = vmatprep.subr.mxu0 0.0
    %357 = vmatpush1.msra.mxu0 %v332
    %358 = vmatprep.subr.mxu0 0.0
    %359 = vmatpush1.msra.mxu0 %v333
    %360 = vmatprep.subr.mxu0 0.0
    %361 = vmatpush1.msra.mxu0 %v334
    %362 = vmatprep.subr.mxu0 0.0
    %363 = vmatpush1.msra.mxu0 %v335
    %364 = vmatprep.subr.mxu0 0.0
    %365 = vmatpush1.msra.mxu0 %v336
    %366 = vmatprep.subr.mxu0 0.0
    %367 = vmatpush1.msra.mxu0 %v337
    %368 = vmatprep.subr.mxu0 0.0
    %369 = vmatpush1.msra.mxu0 %v338
    %370 = vmatprep.subr.mxu0 0.0
    %371 = vmatpush1.msra.mxu0 %v339
    %372 = vmatprep.subr.mxu0 0.0
    %373 = vmatpush1.msra.mxu0 %v340
    %374 = vmatprep.subr.mxu0 0.0
    %375 = vmatpush1.msra.mxu0 %v341
    %376 = vmatprep.subr.mxu0 0.0
    %377 = vmatpush1.msra.mxu0 %v342
    %378 = vmatprep.subr.mxu0 0.0
    %379 = vmatpush1.msra.mxu0 %v343
    %380 = vmatprep.subr.mxu0 0.0
    %381 = vmatpush1.msra.mxu0 0.0
    %382 = vmatprep.subr.mxu0 0.0
    %383 = vmatpush1.msra.mxu0 0.0
    %384 = vmatprep.subr.mxu0 0.0
    %385 = vmatpush1.msra.mxu0 0.0
    %386 = vmatprep.subr.mxu0 0.0
    %387 = vmatpush1.msra.mxu0 0.0
    %388 = vmatprep.subr.mxu0 0.0
    %389 = vmatpush1.msra.mxu0 0.0
    %390 = vmatprep.subr.mxu0 0.0
    %391 = vmatpush1.msra.mxu0 0.0
    %392 = vmatprep.subr.mxu0 0.0
    %393 = vmatpush1.msra.mxu0 0.0
    %394 = vmatprep.subr.mxu0 0.0
    %395 = vmatpush1.msra.mxu0 0.0
    %396 = vmatprep.subr.mxu0 0.0
    %397 = vmatpush1.msra.mxu0 0.0
    %398 = vmatprep.subr.mxu0 0.0
    %399 = vmatpush1.msra.mxu0 0.0
    %400 = vmatprep.subr.mxu0 0.0
    %401 = vmatpush1.msra.mxu0 0.0
    %402 = vmatprep.subr.mxu0 0.0
    %403 = vmatpush1.msra.mxu0 0.0
    %404 = vmatprep.subr.mxu0 0.0
    %405 = vmatpush1.msra.mxu0 0.0
    %406 = vmatprep.subr.mxu0 0.0
    %407 = vmatpush1.msra.mxu0 0.0
    %408 = vmatprep.subr.mxu0 0.0
    %409 = vmatpush1.msra.mxu0 0.0
    %410 = vmatprep.subr.mxu0 0.0
    %411 = vmatpush1.msra.mxu0 0.0
    %412 = vmatprep.mubr.f32.mxu0 0.0
    %413 = vmatmul.mubr.f32.gmra.mrb[0].mxu0 %v325
    %v414 = vpop.f32.mrb[0].mxu0
    %v415 = vadd.f32 %v347, %v414
    %v416 = vpop.f32.mrb[0].mxu0
    %417 = vdwg.mxu0
    %v418 = vmul.f32 %v415, 0.5
    %v419 = vmul.f32 %v415, 0.70710677
    %v420 = verf.f32.pop %v419
    %v421 = vadd.f32 %v420, 1.0
    %v422 = vmul.f32 %v418, %v421
    %v423 = vld [vmem:[#allocation4 + $0x200] sm:$0xff]
    %v424 = vld [vmem:[#allocation4 + $0x208] sm:$0xff]
    %v425 = vld [vmem:[#allocation4 + $0x210] sm:$0xff]
    %v426 = vld [vmem:[#allocation4 + $0x218] sm:$0xff]
    %v427 = vld [vmem:[#allocation4 + $0x220] sm:$0xff]
    %v428 = vld [vmem:[#allocation4 + $0x228] sm:$0xff]
    %v429 = vld [vmem:[#allocation4 + $0x230] sm:$0xff]
    %v430 = vld [vmem:[#allocation4 + $0x238] sm:$0xff]
    %v431 = vld [vmem:[#allocation4 + $0x240] sm:$0xff]
    %v432 = vld [vmem:[#allocation4 + $0x248] sm:$0xff]
    %v433 = vld [vmem:[#allocation4 + $0x250] sm:$0xff]
    %v434 = vld [vmem:[#allocation4 + $0x258] sm:$0xff]
    %v435 = vld [vmem:[#allocation4 + $0x260] sm:$0xff]
    %v436 = vld [vmem:[#allocation4 + $0x268] sm:$0xff]
    %v437 = vld [vmem:[#allocation4 + $0x270] sm:$0xff]
    %v438 = vld [vmem:[#allocation4 + $0x278] sm:$0xff]
    %v439 = vlaneseq
    %v440 = vshrl.u32 %v439, 7
    %v441 = vsub.s32 4, %v440
    %v442 = vrot.slane %v47, %v441
    %443 = vmatprep.subr.mxu0 0.0
    %444 = vmatpush1.msra.mxu0 %v423
    %445 = vmatprep.subr.mxu0 0.0
    %446 = vmatpush1.msra.mxu0 %v424
    %447 = vmatprep.subr.mxu0 0.0
    %448 = vmatpush1.msra.mxu0 %v425
    %449 = vmatprep.subr.mxu0 0.0
    %450 = vmatpush1.msra.mxu0 %v426
    %451 = vmatprep.subr.mxu0 0.0
    %452 = vmatpush1.msra.mxu0 %v427
    %453 = vmatprep.subr.mxu0 0.0
    %454 = vmatpush1.msra.mxu0 %v428
    %455 = vmatprep.subr.mxu0 0.0
    %456 = vmatpush1.msra.mxu0 %v429
    %457 = vmatprep.subr.mxu0 0.0
    %458 = vmatpush1.msra.mxu0 %v430
    %459 = vmatprep.subr.mxu0 0.0
    %460 = vmatpush1.msra.mxu0 %v431
    %461 = vmatprep.subr.mxu0 0.0
    %462 = vmatpush1.msra.mxu0 %v432
    %463 = vmatprep.subr.mxu0 0.0
    %464 = vmatpush1.msra.mxu0 %v433
    %465 = vmatprep.subr.mxu0 0.0
    %466 = vmatpush1.msra.mxu0 %v434
    %467 = vmatprep.subr.mxu0 0.0
    %468 = vmatpush1.msra.mxu0 %v435
    %469 = vmatprep.subr.mxu0 0.0
    %470 = vmatpush1.msra.mxu0 %v436
    %471 = vmatprep.subr.mxu0 0.0
    %472 = vmatpush1.msra.mxu0 %v437
    %473 = vmatprep.subr.mxu0 0.0
    %474 = vmatpush1.msra.mxu0 %v438
    %475 = vmatprep.subr.mxu0 0.0
    %476 = vmatpush1.msra.mxu0 0.0
    %477 = vmatprep.subr.mxu0 0.0
    %478 = vmatpush1.msra.mxu0 0.0
    %479 = vmatprep.subr.mxu0 0.0
    %480 = vmatpush1.msra.mxu0 0.0
    %481 = vmatprep.subr.mxu0 0.0
    %482 = vmatpush1.msra.mxu0 0.0
    %483 = vmatprep.subr.mxu0 0.0
    %484 = vmatpush1.msra.mxu0 0.0
    %485 = vmatprep.subr.mxu0 0.0
    %486 = vmatpush1.msra.mxu0 0.0
    %487 = vmatprep.subr.mxu0 0.0
    %488 = vmatpush1.msra.mxu0 0.0
    %489 = vmatprep.subr.mxu0 0.0
    %490 = vmatpush1.msra.mxu0 0.0
    %491 = vmatprep.subr.mxu0 0.0
    %492 = vmatpush1.msra.mxu0 0.0
    %493 = vmatprep.subr.mxu0 0.0
    %494 = vmatpush1.msra.mxu0 0.0
    %495 = vmatprep.subr.mxu0 0.0
    %496 = vmatpush1.msra.mxu0 0.0
    %497 = vmatprep.subr.mxu0 0.0
    %498 = vmatpush1.msra.mxu0 0.0
    %499 = vmatprep.subr.mxu0 0.0
    %500 = vmatpush1.msra.mxu0 0.0
    %501 = vmatprep.subr.mxu0 0.0
    %502 = vmatpush1.msra.mxu0 0.0
    %503 = vmatprep.subr.mxu0 0.0
    %504 = vmatpush1.msra.mxu0 0.0
    %505 = vmatprep.subr.mxu0 0.0
    %506 = vmatpush1.msra.mxu0 0.0
    %507 = vmatprep.mubr.f32.mxu0 0.0
    %508 = vmatmul.mubr.f32.gmra.mrb[0].mxu0 %v422
    %v509 = vpop.f32.mrb[0].mxu0
    %v510 = vadd.f32 %v442, %v509
    %v511 = vpop.f32.mrb[0].mxu0
    %512 = vdwg.mxu0
    %v513 = vmul.f32 %v510, 0.5
    %v514 = vmul.f32 %v510, 0.70710677
    %v515 = verf.f32.pop %v514
    %v516 = vadd.f32 %v515, 1.0
    %v517 = vmul.f32 %v513, %v516
    %v518 = vld [vmem:[#allocation4 + $0x280] sm:$0xff]
    %v519 = vld [vmem:[#allocation4 + $0x288] sm:$0xff]
    %v520 = vld [vmem:[#allocation4 + $0x290] sm:$0xff]
    %v521 = vld [vmem:[#allocation4 + $0x298] sm:$0xff]
    %v522 = vld [vmem:[#allocation4 + $0x2a0] sm:$0xff]
    %v523 = vld [vmem:[#allocation4 + $0x2a8] sm:$0xff]
    %v524 = vld [vmem:[#allocation4 + $0x2b0] sm:$0xff]
    %v525 = vld [vmem:[#allocation4 + $0x2b8] sm:$0xff]
    %v526 = vld [vmem:[#allocation4 + $0x2c0] sm:$0xff]
    %v527 = vld [vmem:[#allocation4 + $0x2c8] sm:$0xff]
    %v528 = vld [vmem:[#allocation4 + $0x2d0] sm:$0xff]
    %v529 = vld [vmem:[#allocation4 + $0x2d8] sm:$0xff]
    %v530 = vld [vmem:[#allocation4 + $0x2e0] sm:$0xff]
    %v531 = vld [vmem:[#allocation4 + $0x2e8] sm:$0xff]
    %v532 = vld [vmem:[#allocation4 + $0x2f0] sm:$0xff]
    %v533 = vld [vmem:[#allocation4 + $0x2f8] sm:$0xff]
    %v534 = vlaneseq
    %v535 = vshrl.u32 %v534, 7
    %v536 = vsub.s32 5, %v535
    %v537 = vrot.slane %v47, %v536
    %538 = vmatprep.subr.mxu0 0.0
    %539 = vmatpush1.msra.mxu0 %v518
    %540 = vmatprep.subr.mxu0 0.0
    %541 = vmatpush1.msra.mxu0 %v519
    %542 = vmatprep.subr.mxu0 0.0
    %543 = vmatpush1.msra.mxu0 %v520
    %544 = vmatprep.subr.mxu0 0.0
    %545 = vmatpush1.msra.mxu0 %v521
    %546 = vmatprep.subr.mxu0 0.0
    %547 = vmatpush1.msra.mxu0 %v522
    %548 = vmatprep.subr.mxu0 0.0
    %549 = vmatpush1.msra.mxu0 %v523
    %550 = vmatprep.subr.mxu0 0.0
    %551 = vmatpush1.msra.mxu0 %v524
    %552 = vmatprep.subr.mxu0 0.0
    %553 = vmatpush1.msra.mxu0 %v525
    %554 = vmatprep.subr.mxu0 0.0
    %555 = vmatpush1.msra.mxu0 %v526
    %556 = vmatprep.subr.mxu0 0.0
    %557 = vmatpush1.msra.mxu0 %v527
    %558 = vmatprep.subr.mxu0 0.0
    %559 = vmatpush1.msra.mxu0 %v528
    %560 = vmatprep.subr.mxu0 0.0
    %561 = vmatpush1.msra.mxu0 %v529
    %562 = vmatprep.subr.mxu0 0.0
    %563 = vmatpush1.msra.mxu0 %v530
    %564 = vmatprep.subr.mxu0 0.0
    %565 = vmatpush1.msra.mxu0 %v531
    %566 = vmatprep.subr.mxu0 0.0
    %567 = vmatpush1.msra.mxu0 %v532
    %568 = vmatprep.subr.mxu0 0.0
    %569 = vmatpush1.msra.mxu0 %v533
    %570 = vmatprep.subr.mxu0 0.0
    %571 = vmatpush1.msra.mxu0 0.0
    %572 = vmatprep.subr.mxu0 0.0
    %573 = vmatpush1.msra.mxu0 0.0
    %574 = vmatprep.subr.mxu0 0.0
    %575 = vmatpush1.msra.mxu0 0.0
    %576 = vmatprep.subr.mxu0 0.0
    %577 = vmatpush1.msra.mxu0 0.0
    %578 = vmatprep.subr.mxu0 0.0
    %579 = vmatpush1.msra.mxu0 0.0
    %580 = vmatprep.subr.mxu0 0.0
    %581 = vmatpush1.msra.mxu0 0.0
    %582 = vmatprep.subr.mxu0 0.0
    %583 = vmatpush1.msra.mxu0 0.0
    %584 = vmatprep.subr.mxu0 0.0
    %585 = vmatpush1.msra.mxu0 0.0
    %586 = vmatprep.subr.mxu0 0.0
    %587 = vmatpush1.msra.mxu0 0.0
    %588 = vmatprep.subr.mxu0 0.0
    %589 = vmatpush1.msra.mxu0 0.0
    %590 = vmatprep.subr.mxu0 0.0
    %591 = vmatpush1.msra.mxu0 0.0
    %592 = vmatprep.subr.mxu0 0.0
    %593 = vmatpush1.msra.mxu0 0.0
    %594 = vmatprep.subr.mxu0 0.0
    %595 = vmatpush1.msra.mxu0 0.0
    %596 = vmatprep.subr.mxu0 0.0
    %597 = vmatpush1.msra.mxu0 0.0
    %598 = vmatprep.subr.mxu0 0.0
    %599 = vmatpush1.msra.mxu0 0.0
    %600 = vmatprep.subr.mxu0 0.0
    %601 = vmatpush1.msra.mxu0 0.0
    %602 = vmatprep.mubr.f32.mxu0 0.0
    %603 = vmatmul.mubr.f32.gmra.mrb[0].mxu0 %v517
    %v604 = vpop.f32.mrb[0].mxu0
    %v605 = vadd.f32 %v537, %v604
    %v606 = vpop.f32.mrb[0].mxu0
    %607 = vdwg.mxu0
    %608 = vst [vmem:[%s4] sm:$0xff] %v605
    // Predicated region
    $region22: #{model_forward.1} parent=1 // pred_check
      _
    $region23: #{model_forward.1} parent=1 // pred_check_branch
      %610 = sbr.rel (0) target = $region25
    $region24: #{model_forward.1} parent=1 // pred_region
      _
    $region25: #{model_forward.1} parent=1 // pred_fallthru
      _
    // Predicated region
    $region26: #{model_forward.1} parent=1 // pred_check
      _
    $region27: #{model_forward.1} parent=1 // pred_check_branch
      %612 = sbr.rel (0) target = $region29
    $region28: #{model_forward.1} parent=1 // pred_region
      _
    $region29: #{model_forward.1} parent=1 // pred_fallthru
      _
    %613 = vsyncpa [#allocation5], 1
    %614 = vsyncpa [#allocation7], 1

</llo_original>
